<compile_context>
chip_gen: v7x
topology: tpu7x:2x2x1
jax: 0.10.0
libtpu: 0.0.40
codegen_flags: <defaults>
</compile_context>

<pallas_src>
import functools

import jax
import jax.numpy as jnp
from jax import lax
from jax.experimental import pallas as pl
from jax.experimental.pallas import tpu as pltpu


# ----------------------------------------------------------------------------
# Banded weight: fold the 3 kx taps + the implicit W zero-padding into a dense
# (W*Cin, W*Cout) matrix per ky, so each conv is 3 deep matmuls.
# ----------------------------------------------------------------------------
def _band_weight(w, W):
    # w: (3, 3, Cin, Cout)  (ky, kx, cin, cout)  ->  (3, W*Cin, W*Cout)
    _, _, Cin, Cout = w.shape
    a = jnp.arange(W)   # input (real) column
    j = jnp.arange(W)   # output column
    kx = jnp.arange(3)
    # sel[kx, a, j] = 1  iff  input column a == j + kx - 1  (pad columns drop out)
    sel = (a[None, :, None] == (j[None, None, :] + kx[:, None, None] - 1))
    sel = sel.astype(w.dtype)
    wb = jnp.einsum("xaj,yxcm->yacjm", sel, w)      # (3, W, Cin, W, Cout)
    return wb.reshape(3, W * Cin, W * Cout)


def _fold_bn(gamma, beta, mean, var, bias, eps=1e-5):
    # BN(conv(x) + bias) == scale * conv(x) + shift   (eval mode)
    scale = gamma / jnp.sqrt(var + eps)
    shift = beta + scale * (bias - mean)
    return scale, shift


def prepare_params(params, W):
    """One-time parameter preparation (hoisted out of the per-call forward)."""
    Cmid = params["w1"].shape[-1]
    Cout = params["w2"].shape[-1]
    # quantize conv weights to bf16 (exactly what the MXU sees)
    w1q = params["w1"].astype(jnp.bfloat16).astype(jnp.float32)
    w2q = params["w2"].astype(jnp.bfloat16).astype(jnp.float32)
    wb1 = _band_weight(w1q, W).astype(jnp.bfloat16)    # (3, W*Cin,  W*Cmid)
    wb2 = _band_weight(w2q, W).astype(jnp.bfloat16)    # (3, W*Cmid, W*Cout)

    s1, t1 = _fold_bn(params["g1"], params["be1"], params["m1"],
                      params["v1"], params["b1"])
    s2, t2 = _fold_bn(params["g2"], params["be2"], params["m2"],
                      params["v2"], params["b2"])
    # tile per-channel affine across W so the epilogue is lane-dense
    s1 = jnp.tile(s1, W).reshape(1, W * Cmid).astype(jnp.float32)
    t1 = jnp.tile(t1, W).reshape(1, W * Cmid).astype(jnp.float32)
    s2 = jnp.tile(s2, W).reshape(1, W * Cout).astype(jnp.float32)
    t2 = jnp.tile(t2, W).reshape(1, W * Cout).astype(jnp.float32)
    return {"wb1": wb1, "s1": s1, "t1": t1, "wb2": wb2, "s2": s2, "t2": t2}


def _pick_b_blk(N, H, target_rows=128):
    """Largest batch block with M = b*H <= target_rows, keeping >=2 grid steps
    when N >= 2 so v7x's two TensorCores both get work."""
    best = 1
    for b in range(1, N + 1):
        if N % b != 0:
            continue
        if b * H > target_rows:
            continue
        if N >= 2 and N // b < 2:
            continue
        best = b
    return best


# ----------------------------------------------------------------------------
# Fused kernel: (conv3x3 + BN + ReLU) x 2 for B_blk batch elements per step.
# ----------------------------------------------------------------------------
def _fcn_double_conv_kernel(x_ref, w1_ref, s1_ref, t1_ref,
                            w2_ref, s2_ref, t2_ref,
                            o_ref, mid_ref, *, B, H, W, c_in, c_mid, c_out):
    KI = W * c_in
    KM = W * c_mid
    KO = W * c_out
    M = B * H

    # ---- conv1: 3 banded matmuls over all B*H rows; acc init by ky=0 dot.
    acc = jnp.dot(x_ref[:, 0:H, :].reshape(M, KI), w1_ref[0],
                  preferred_element_type=jnp.float32)
    acc += jnp.dot(x_ref[:, 1:H + 1, :].reshape(M, KI), w1_ref[1],
                   preferred_element_type=jnp.float32)
    acc += jnp.dot(x_ref[:, 2:H + 2, :].reshape(M, KI), w1_ref[2],
                   preferred_element_type=jnp.float32)
    # folded BatchNorm (bias already inside the shift) + ReLU, f32 epilogue
    y1 = jnp.maximum(acc * s1_ref[...] + t1_ref[...], 0.0)      # (M, KM)

    # ---- re-pad rows for conv2; intermediate stays in VMEM as bf16.
    # NOTE: zero the pad rows every step (not only at program_id==0): with
    # "parallel" semantics each TensorCore has its own scratch and may never
    # see program_id 0.
    zero_row = jnp.zeros((B, 1, KM), jnp.bfloat16)
    mid_ref[:, 0:1, :] = zero_row
    mid_ref[:, H + 1:H + 2, :] = zero_row
    mid_ref[:, 1:H + 1, :] = y1.astype(jnp.bfloat16).reshape(B, H, KM)

    # ---- conv2: 3 banded matmuls (bf16 operands straight from scratch)
    acc2 = jnp.dot(mid_ref[:, 0:H, :].reshape(M, KM), w2_ref[0],
                   preferred_element_type=jnp.float32)
    acc2 += jnp.dot(mid_ref[:, 1:H + 1, :].reshape(M, KM), w2_ref[1],
                    preferred_element_type=jnp.float32)
    acc2 += jnp.dot(mid_ref[:, 2:H + 2, :].reshape(M, KM), w2_ref[2],
                    preferred_element_type=jnp.float32)
    y2 = jnp.maximum(acc2 * s2_ref[...] + t2_ref[...], 0.0)     # (M, KO)

    # lane-dense store: last dim is W*Cout (128 at these shapes)
    o_ref[...] = y2.reshape(B, H, KO)


def fcn_layer_forward(x_nchw, prep):
    N, Cin, H, W = x_nchw.shape
    Cmid = prep["wb1"].shape[-1] // W
    Cout = prep["wb2"].shape[-1] // W
    b_blk = _pick_b_blk(N, H)

    # NCHW -> NHWC at the boundary; bf16 operands for the MXU.
    x = jnp.transpose(x_nchw, (0, 2, 3, 1)).astype(jnp.bfloat16)
    # single row pad (column pad is folded into the banded weights),
    # then a free contiguous reshape to the (rows, W*Cin) lane layout
    xp = jnp.pad(x, ((0, 0), (1, 1), (0, 0), (0, 0)))
    xp = xp.reshape(N, H + 2, W * Cin)

    kern = functools.partial(_fcn_double_conv_kernel,
                             B=b_blk, H=H, W=W,
                             c_in=Cin, c_mid=Cmid, c_out=Cout)
    out = pl.pallas_call(
        kern,
        out_shape=jax.ShapeDtypeStruct((N, H, W * Cout), jnp.float32),
        grid=(N // b_blk,),
        in_specs=[
            pl.BlockSpec((b_blk, H + 2, W * Cin), lambda n: (n, 0, 0)),
            pl.BlockSpec((3, W * Cin, W * Cmid), lambda n: (0, 0, 0)),
            pl.BlockSpec((1, W * Cmid), lambda n: (0, 0)),
            pl.BlockSpec((1, W * Cmid), lambda n: (0, 0)),
            pl.BlockSpec((3, W * Cmid, W * Cout), lambda n: (0, 0, 0)),
            pl.BlockSpec((1, W * Cout), lambda n: (0, 0)),
            pl.BlockSpec((1, W * Cout), lambda n: (0, 0)),
        ],
        out_specs=pl.BlockSpec((b_blk, H, W * Cout), lambda n: (n, 0, 0)),
        scratch_shapes=[pltpu.VMEM((b_blk, H + 2, W * Cmid), jnp.bfloat16)],
        compiler_params=pltpu.CompilerParams(
            dimension_semantics=("parallel",)),   # v7x: steps across 2 TCs
    )(xp, prep["wb1"], prep["s1"], prep["t1"],
      prep["wb2"], prep["s2"], prep["t2"])

    # metadata-only reshape, then single boundary transpose back to NCHW
    out = out.reshape(N, H, W, Cout)
    return jnp.transpose(out, (0, 3, 1, 2))


# ----------------------------------------------------------------------------
# Deterministic synthetic parameters.
# ----------------------------------------------------------------------------
def make_params(key, c_in, c_out):
    ks = jax.random.split(key, 12)
    p = {}
    p["w1"] = 0.1 * jax.random.normal(ks[0], (3, 3, c_in, c_out), jnp.float32)
    p["b1"] = 0.01 * jax.random.normal(ks[1], (c_out,), jnp.float32)
    p["g1"] = 1.0 + 0.1 * jax.random.normal(ks[2], (c_out,), jnp.float32)
    p["be1"] = 0.1 * jax.random.normal(ks[3], (c_out,), jnp.float32)
    p["m1"] = 0.05 * jax.random.normal(ks[4], (c_out,), jnp.float32)
    p["v1"] = 0.5 + jax.random.uniform(ks[5], (c_out,), jnp.float32)

    p["w2"] = 0.1 * jax.random.normal(ks[6], (3, 3, c_out, c_out), jnp.float32)
    p["b2"] = 0.01 * jax.random.normal(ks[7], (c_out,), jnp.float32)
    p["g2"] = 1.0 + 0.1 * jax.random.normal(ks[8], (c_out,), jnp.float32)
    p["be2"] = 0.1 * jax.random.normal(ks[9], (c_out,), jnp.float32)
    p["m2"] = 0.05 * jax.random.normal(ks[10], (c_out,), jnp.float32)
    p["v2"] = 0.5 + jax.random.uniform(ks[11], (c_out,), jnp.float32)
    return p


# ----------------------------------------------------------------------------
# Pure-JAX reference (same bf16 operand quantization, f32 accumulation).
# ----------------------------------------------------------------------------
def fcn_layer_reference(x_nchw, params):
    q = lambda v: v.astype(jnp.bfloat16).astype(jnp.float32)
    x = jnp.transpose(x_nchw, (0, 2, 3, 1)).astype(jnp.float32)

    s1, t1 = _fold_bn(params["g1"], params["be1"], params["m1"],
                      params["v1"], params["b1"])
    s2, t2 = _fold_bn(params["g2"], params["be2"], params["m2"],
                      params["v2"], params["b2"])

    def block(x, w, s, t):
        y = lax.conv_general_dilated(
            q(x), q(w), window_strides=(1, 1), padding="SAME",
            dimension_numbers=("NHWC", "HWIO", "NHWC"),
            precision=lax.Precision.HIGHEST,
            preferred_element_type=jnp.float32)
        return jnp.maximum(y * s + t, 0.0)

    y = block(x, params["w1"], s1, t1)
    y = block(y, params["w2"], s2, t2)
    return jnp.transpose(y, (0, 3, 1, 2))


if __name__ == "__main__":
    key = jax.random.PRNGKey(0)
    k_x, k_p = jax.random.split(key)

    in_channels, out_channels = 4, 8
    N, H, W = 2, 16, 16
    x = jax.random.normal(k_x, (N, in_channels, H, W), jnp.float32)  # NCHW
    params = make_params(k_p, in_channels, out_channels)

    # one-time parameter prep (banded weights, folded BN, tiled scale/shift)
    prep = prepare_params(params, W)

    fwd = jax.jit(fcn_layer_forward)
    out = jax.block_until_ready(fwd(x, prep))

    ref = fcn_layer_reference(x, params)
    assert out.shape == (N, out_channels, H, W), out.shape
    err = float(jnp.max(jnp.abs(out - ref)))
    assert jnp.allclose(out, ref, rtol=1e-3, atol=1e-3), err

    print("KERNEL_OK")
</pallas_src>

<mosaic_0001>
module attributes {stable_mosaic.version = 11 : i64} {
  func.func @_fcn_double_conv_kernel(%arg0: i32, %arg1: memref<1x18x64xbf16, #tpu.memory_space<vmem>>, %arg2: memref<3x64x128xbf16, #tpu.memory_space<vmem>>, %arg3: memref<1x128xf32, #tpu.memory_space<vmem>>, %arg4: memref<1x128xf32, #tpu.memory_space<vmem>>, %arg5: memref<3x128x128xbf16, #tpu.memory_space<vmem>>, %arg6: memref<1x128xf32, #tpu.memory_space<vmem>>, %arg7: memref<1x128xf32, #tpu.memory_space<vmem>>, %arg8: memref<1x16x128xf32, #tpu.memory_space<vmem>>, %arg9: memref<1x18x128xbf16, #tpu.memory_space<vmem>>) attributes {dimension_semantics = [#tpu.dimension_semantics<parallel>], iteration_bounds = array<i64: 2>, scalar_prefetch = 0 : i64, scratch_operands = 1 : i64, tpu.core_type = #tpu.core_type<tc>, window_params = [{transform_indices = @transform_0, window_bounds = array<i64: 1, 18, 64>}, {pipeline_mode = #tpu.pipeline_mode<synchronous>, transform_indices = @transform_1, window_bounds = array<i64: 3, 64, 128>}, {pipeline_mode = #tpu.pipeline_mode<synchronous>, transform_indices = @transform_2, window_bounds = array<i64: 1, 128>}, {pipeline_mode = #tpu.pipeline_mode<synchronous>, transform_indices = @transform_3, window_bounds = array<i64: 1, 128>}, {pipeline_mode = #tpu.pipeline_mode<synchronous>, transform_indices = @transform_4, window_bounds = array<i64: 3, 128, 128>}, {pipeline_mode = #tpu.pipeline_mode<synchronous>, transform_indices = @transform_5, window_bounds = array<i64: 1, 128>}, {pipeline_mode = #tpu.pipeline_mode<synchronous>, transform_indices = @transform_6, window_bounds = array<i64: 1, 128>}, {transform_indices = @transform_7, window_bounds = array<i64: 1, 16, 128>}]} {
    %c0 = arith.constant 0 : index
    %c0_0 = arith.constant 0 : index
    %c0_1 = arith.constant 0 : index
    %0 = vector.load %arg1[%c0, %c0_0, %c0_1] : memref<1x18x64xbf16, #tpu.memory_space<vmem>>, vector<1x16x64xbf16>
    %1 = vector.shape_cast %0 : vector<1x16x64xbf16> to vector<16x64xbf16>
    %c0_2 = arith.constant 0 : index
    %c0_3 = arith.constant 0 : index
    %c0_4 = arith.constant 0 : index
    %2 = vector.load %arg2[%c0_2, %c0_3, %c0_4] : memref<3x64x128xbf16, #tpu.memory_space<vmem>>, vector<1x64x128xbf16>
    %3 = vector.shape_cast %2 : vector<1x64x128xbf16> to vector<64x128xbf16>
    %cst = arith.constant dense<0.000000e+00> : vector<16x128xf32>
    %4 = tpu.matmul %1, %3, %cst {dimension_numbers = #tpu.dot_dimension_numbers<[1], [0], [0], [1], [0, 0, 1, 1], [], []>} : vector<16x64xbf16>, vector<64x128xbf16>, vector<16x128xf32> -> vector<16x128xf32>
    %c0_5 = arith.constant 0 : index
    %c1 = arith.constant 1 : index
    %c0_6 = arith.constant 0 : index
    %5 = vector.load %arg1[%c0_5, %c1, %c0_6] : memref<1x18x64xbf16, #tpu.memory_space<vmem>>, vector<1x16x64xbf16>
    %6 = vector.shape_cast %5 : vector<1x16x64xbf16> to vector<16x64xbf16>
    %c1_7 = arith.constant 1 : index
    %c0_8 = arith.constant 0 : index
    %c0_9 = arith.constant 0 : index
    %7 = vector.load %arg2[%c1_7, %c0_8, %c0_9] : memref<3x64x128xbf16, #tpu.memory_space<vmem>>, vector<1x64x128xbf16>
    %8 = vector.shape_cast %7 : vector<1x64x128xbf16> to vector<64x128xbf16>
    %cst_10 = arith.constant dense<0.000000e+00> : vector<16x128xf32>
    %9 = tpu.matmul %6, %8, %cst_10 {dimension_numbers = #tpu.dot_dimension_numbers<[1], [0], [0], [1], [0, 0, 1, 1], [], []>} : vector<16x64xbf16>, vector<64x128xbf16>, vector<16x128xf32> -> vector<16x128xf32>
    %10 = arith.addf %4, %9 : vector<16x128xf32>
    %c0_11 = arith.constant 0 : index
    %c2 = arith.constant 2 : index
    %c0_12 = arith.constant 0 : index
    %11 = vector.load %arg1[%c0_11, %c2, %c0_12] : memref<1x18x64xbf16, #tpu.memory_space<vmem>>, vector<1x16x64xbf16>
    %12 = vector.shape_cast %11 : vector<1x16x64xbf16> to vector<16x64xbf16>
    %c2_13 = arith.constant 2 : index
    %c0_14 = arith.constant 0 : index
    %c0_15 = arith.constant 0 : index
    %13 = vector.load %arg2[%c2_13, %c0_14, %c0_15] : memref<3x64x128xbf16, #tpu.memory_space<vmem>>, vector<1x64x128xbf16>
    %14 = vector.shape_cast %13 : vector<1x64x128xbf16> to vector<64x128xbf16>
    %cst_16 = arith.constant dense<0.000000e+00> : vector<16x128xf32>
    %15 = tpu.matmul %12, %14, %cst_16 {dimension_numbers = #tpu.dot_dimension_numbers<[1], [0], [0], [1], [0, 0, 1, 1], [], []>} : vector<16x64xbf16>, vector<64x128xbf16>, vector<16x128xf32> -> vector<16x128xf32>
    %16 = arith.addf %10, %15 : vector<16x128xf32>
    %c0_17 = arith.constant 0 : index
    %c0_18 = arith.constant 0 : index
    %17 = vector.load %arg3[%c0_17, %c0_18] : memref<1x128xf32, #tpu.memory_space<vmem>>, vector<1x128xf32>
    %18 = vector.broadcast %17 : vector<1x128xf32> to vector<16x128xf32>
    %19 = arith.mulf %16, %18 : vector<16x128xf32>
    %c0_19 = arith.constant 0 : index
    %c0_20 = arith.constant 0 : index
    %20 = vector.load %arg4[%c0_19, %c0_20] : memref<1x128xf32, #tpu.memory_space<vmem>>, vector<1x128xf32>
    %21 = vector.broadcast %20 : vector<1x128xf32> to vector<16x128xf32>
    %22 = arith.addf %19, %21 : vector<16x128xf32>
    %cst_21 = arith.constant 0.000000e+00 : f32
    %23 = vector.broadcast %cst_21 : f32 to vector<16x128xf32>
    %24 = arith.maximumf %22, %23 : vector<16x128xf32>
    %cst_22 = arith.constant 0.000000e+00 : bf16
    %25 = vector.broadcast %cst_22 : bf16 to vector<1x1x128xbf16>
    %c0_23 = arith.constant 0 : index
    %c0_24 = arith.constant 0 : index
    %c0_25 = arith.constant 0 : index
    %26 = vector.load %arg9[%c0_23, %c0_24, %c0_25] : memref<1x18x128xbf16, #tpu.memory_space<vmem>>, vector<1x1x128xbf16>
    tpu.vector_store %arg9[%c0_23, %c0_24, %c0_25], %25 {strides = array<i32>} : memref<1x18x128xbf16, #tpu.memory_space<vmem>>, vector<1x1x128xbf16>,
    %c0_26 = arith.constant 0 : index
    %c17 = arith.constant 17 : index
    %c0_27 = arith.constant 0 : index
    %27 = vector.load %arg9[%c0_26, %c17, %c0_27] : memref<1x18x128xbf16, #tpu.memory_space<vmem>>, vector<1x1x128xbf16>
    tpu.vector_store %arg9[%c0_26, %c17, %c0_27], %25 {strides = array<i32>} : memref<1x18x128xbf16, #tpu.memory_space<vmem>>, vector<1x1x128xbf16>,
    %28 = arith.truncf %24 : vector<16x128xf32> to vector<16x128xbf16>
    %29 = vector.shape_cast %28 : vector<16x128xbf16> to vector<1x16x128xbf16>
    %c0_28 = arith.constant 0 : index
    %c1_29 = arith.constant 1 : index
    %c0_30 = arith.constant 0 : index
    %30 = vector.load %arg9[%c0_28, %c1_29, %c0_30] : memref<1x18x128xbf16, #tpu.memory_space<vmem>>, vector<1x16x128xbf16>
    tpu.vector_store %arg9[%c0_28, %c1_29, %c0_30], %29 {strides = array<i32>} : memref<1x18x128xbf16, #tpu.memory_space<vmem>>, vector<1x16x128xbf16>,
    %c0_31 = arith.constant 0 : index
    %c0_32 = arith.constant 0 : index
    %c0_33 = arith.constant 0 : index
    %31 = vector.load %arg9[%c0_31, %c0_32, %c0_33] : memref<1x18x128xbf16, #tpu.memory_space<vmem>>, vector<1x16x128xbf16>
    %32 = vector.shape_cast %31 : vector<1x16x128xbf16> to vector<16x128xbf16>
    %c0_34 = arith.constant 0 : index
    %c0_35 = arith.constant 0 : index
    %c0_36 = arith.constant 0 : index
    %33 = vector.load %arg5[%c0_34, %c0_35, %c0_36] : memref<3x128x128xbf16, #tpu.memory_space<vmem>>, vector<1x128x128xbf16>
    %34 = vector.shape_cast %33 : vector<1x128x128xbf16> to vector<128x128xbf16>
    %cst_37 = arith.constant dense<0.000000e+00> : vector<16x128xf32>
    %35 = tpu.matmul %32, %34, %cst_37 {dimension_numbers = #tpu.dot_dimension_numbers<[1], [0], [0], [1], [0, 0, 1, 1], [], []>} : vector<16x128xbf16>, vector<128x128xbf16>, vector<16x128xf32> -> vector<16x128xf32>
    %c0_38 = arith.constant 0 : index
    %c1_39 = arith.constant 1 : index
    %c0_40 = arith.constant 0 : index
    %36 = vector.load %arg9[%c0_38, %c1_39, %c0_40] : memref<1x18x128xbf16, #tpu.memory_space<vmem>>, vector<1x16x128xbf16>
    %37 = vector.shape_cast %36 : vector<1x16x128xbf16> to vector<16x128xbf16>
    %c1_41 = arith.constant 1 : index
    %c0_42 = arith.constant 0 : index
    %c0_43 = arith.constant 0 : index
    %38 = vector.load %arg5[%c1_41, %c0_42, %c0_43] : memref<3x128x128xbf16, #tpu.memory_space<vmem>>, vector<1x128x128xbf16>
    %39 = vector.shape_cast %38 : vector<1x128x128xbf16> to vector<128x128xbf16>
    %cst_44 = arith.constant dense<0.000000e+00> : vector<16x128xf32>
    %40 = tpu.matmul %37, %39, %cst_44 {dimension_numbers = #tpu.dot_dimension_numbers<[1], [0], [0], [1], [0, 0, 1, 1], [], []>} : vector<16x128xbf16>, vector<128x128xbf16>, vector<16x128xf32> -> vector<16x128xf32>
    %41 = arith.addf %35, %40 : vector<16x128xf32>
    %c0_45 = arith.constant 0 : index
    %c2_46 = arith.constant 2 : index
    %c0_47 = arith.constant 0 : index
    %42 = vector.load %arg9[%c0_45, %c2_46, %c0_47] : memref<1x18x128xbf16, #tpu.memory_space<vmem>>, vector<1x16x128xbf16>
    %43 = vector.shape_cast %42 : vector<1x16x128xbf16> to vector<16x128xbf16>
    %c2_48 = arith.constant 2 : index
    %c0_49 = arith.constant 0 : index
    %c0_50 = arith.constant 0 : index
    %44 = vector.load %arg5[%c2_48, %c0_49, %c0_50] : memref<3x128x128xbf16, #tpu.memory_space<vmem>>, vector<1x128x128xbf16>
    %45 = vector.shape_cast %44 : vector<1x128x128xbf16> to vector<128x128xbf16>
    %cst_51 = arith.constant dense<0.000000e+00> : vector<16x128xf32>
    %46 = tpu.matmul %43, %45, %cst_51 {dimension_numbers = #tpu.dot_dimension_numbers<[1], [0], [0], [1], [0, 0, 1, 1], [], []>} : vector<16x128xbf16>, vector<128x128xbf16>, vector<16x128xf32> -> vector<16x128xf32>
    %47 = arith.addf %41, %46 : vector<16x128xf32>
    %c0_52 = arith.constant 0 : index
    %c0_53 = arith.constant 0 : index
    %48 = vector.load %arg6[%c0_52, %c0_53] : memref<1x128xf32, #tpu.memory_space<vmem>>, vector<1x128xf32>
    %49 = vector.broadcast %48 : vector<1x128xf32> to vector<16x128xf32>
    %50 = arith.mulf %47, %49 : vector<16x128xf32>
    %c0_54 = arith.constant 0 : index
    %c0_55 = arith.constant 0 : index
    %51 = vector.load %arg7[%c0_54, %c0_55] : memref<1x128xf32, #tpu.memory_space<vmem>>, vector<1x128xf32>
    %52 = vector.broadcast %51 : vector<1x128xf32> to vector<16x128xf32>
    %53 = arith.addf %50, %52 : vector<16x128xf32>
    %cst_56 = arith.constant 0.000000e+00 : f32
    %54 = vector.broadcast %cst_56 : f32 to vector<16x128xf32>
    %55 = arith.maximumf %53, %54 : vector<16x128xf32>
    %56 = vector.shape_cast %55 : vector<16x128xf32> to vector<1x16x128xf32>
    %c0_57 = arith.constant 0 : index
    %c0_58 = arith.constant 0 : index
    %c0_59 = arith.constant 0 : index
    %57 = vector.load %arg8[%c0_57, %c0_58, %c0_59] : memref<1x16x128xf32, #tpu.memory_space<vmem>>, vector<1x16x128xf32>
    tpu.vector_store %arg8[%c0_57, %c0_58, %c0_59], %56 {strides = array<i32>} : memref<1x16x128xf32, #tpu.memory_space<vmem>>, vector<1x16x128xf32>,
    return
  }
  func.func @transform_0(%arg0: i32) -> (i32, i32, i32) {
    %c0_i32 = arith.constant 0 : i32
    %c0_i32_0 = arith.constant 0 : i32
    %c0_i32_1 = arith.constant 0 : i32
    return %arg0, %c0_i32, %c0_i32_0 : i32, i32, i32
  }
  func.func @transform_1(%arg0: i32) -> (i32, i32, i32) {
    %c0_i32 = arith.constant 0 : i32
    %c0_i32_0 = arith.constant 0 : i32
    %c0_i32_1 = arith.constant 0 : i32
    %c0_i32_2 = arith.constant 0 : i32
    return %c0_i32, %c0_i32_0, %c0_i32_1 : i32, i32, i32
  }
  func.func @transform_2(%arg0: i32) -> (i32, i32) {
    %c0_i32 = arith.constant 0 : i32
    %c0_i32_0 = arith.constant 0 : i32
    %c0_i32_1 = arith.constant 0 : i32
    return %c0_i32, %c0_i32_0 : i32, i32
  }
  func.func @transform_3(%arg0: i32) -> (i32, i32) {
    %c0_i32 = arith.constant 0 : i32
    %c0_i32_0 = arith.constant 0 : i32
    %c0_i32_1 = arith.constant 0 : i32
    return %c0_i32, %c0_i32_0 : i32, i32
  }
  func.func @transform_4(%arg0: i32) -> (i32, i32, i32) {
    %c0_i32 = arith.constant 0 : i32
    %c0_i32_0 = arith.constant 0 : i32
    %c0_i32_1 = arith.constant 0 : i32
    %c0_i32_2 = arith.constant 0 : i32
    return %c0_i32, %c0_i32_0, %c0_i32_1 : i32, i32, i32
  }
  func.func @transform_5(%arg0: i32) -> (i32, i32) {
    %c0_i32 = arith.constant 0 : i32
    %c0_i32_0 = arith.constant 0 : i32
    %c0_i32_1 = arith.constant 0 : i32
    return %c0_i32, %c0_i32_0 : i32, i32
  }
  func.func @transform_6(%arg0: i32) -> (i32, i32) {
    %c0_i32 = arith.constant 0 : i32
    %c0_i32_0 = arith.constant 0 : i32
    %c0_i32_1 = arith.constant 0 : i32
    return %c0_i32, %c0_i32_0 : i32, i32
  }
  func.func @transform_7(%arg0: i32) -> (i32, i32, i32) {
    %c0_i32 = arith.constant 0 : i32
    %c0_i32_0 = arith.constant 0 : i32
    %c0_i32_1 = arith.constant 0 : i32
    return %arg0, %c0_i32, %c0_i32_0 : i32, i32, i32
  }
}

</mosaic_0001>

<llo_original>
// kernel: fcn_layer_forward.1
$region0: #{fcn_layer_forward.1}
  #allocation0 [shape = 'u32[]', space=smem, size = 0x4, offset = 0x4, fixed_abs, tag = 'smem constant byte address 0x4 - core index']
  #allocation1 [shape = 'u32[144,128]{1,0:T(1,128)}', space=vmem, size = 0x12000, scoped, tag = 'internal scratch']
  #allocation2 [shape = 'bf16[1,18,128]{2,1,0:T(8,128)(2,1)}', space=vmem, size = 0x1800, scoped, tag = 'scratch operand']
  %s0 = inlined_call_operand.vmem [shape: bf16[2,18,64], index: 0, kind: input, shape index: {}]
  %s1 = inlined_call_operand.vmem [shape: bf16[3,64,128], index: 1, kind: input, shape index: {}]
  %s2 = inlined_call_operand.vmem [shape: f32[1,128], index: 2, kind: input, shape index: {}]
  %s3 = inlined_call_operand.vmem [shape: f32[1,128], index: 3, kind: input, shape index: {}]
  %s4 = inlined_call_operand.vmem [shape: bf16[3,128,128], index: 4, kind: input, shape index: {}]
  %s5 = inlined_call_operand.vmem [shape: f32[1,128], index: 5, kind: input, shape index: {}]
  %s6 = inlined_call_operand.vmem [shape: f32[1,128], index: 6, kind: input, shape index: {}]
  %s7 = inlined_call_operand.vmem [shape: f32[2,16,128], index: 7, kind: output, shape index: {}]
  %s8 = sld [smem:[#allocation0]]
  $region61: #{fcn_layer_forward.1} parent=0
    _
  %s10 = ssub.s32 1, %s8
  %s11 = scalar_select 0, %s10, %s8
  loop: start=0, step=1, limit=4
  $region2: #{fcn_layer_forward.1} parent=0 // loop_pre_header
    _
  $region3: #{fcn_layer_forward.1} parent=0 // loop_header
    %s13 = sphi 0, %s17
    %p14 = scmp.ge.s32.totalorder %s13, 4
    %s23 = sphi 0, %s25
    %s26 = sphi 0, %s23
    %s27 = sphi 0, %s26
    %s43 = sphi 0, %s27
    %s47 = sphi 0, %s47
    %s49 = sphi 0, %s47
    %s50 = sphi 0, %s49
    %s64 = sphi 0, %s50
    %s68 = sphi 0, %s68
    %s70 = sphi 0, %s68
    %s71 = sphi 0, %s70
    %s85 = sphi 0, %s71
    %s89 = sphi 0, %s89
    %s91 = sphi 0, %s89
    %s92 = sphi 0, %s91
    %s106 = sphi 0, %s92
    %s110 = sphi 0, %s110
    %s112 = sphi 0, %s110
    %s113 = sphi 0, %s112
    %s127 = sphi 0, %s113
    %s131 = sphi 0, %s131
    %s133 = sphi 0, %s131
    %s134 = sphi 0, %s133
    %s148 = sphi 0, %s134
    %s152 = sphi 0, %s152
    %s154 = sphi 0, %s152
    %s155 = sphi 0, %s154
    %s169 = sphi 0, %s155
    %s175 = sphi 0, %s177
    %s178 = sphi 0, %s175
    %s179 = sphi 0, %s178
    %s195 = sphi 0, %s179
  $region4: #{fcn_layer_forward.1} parent=0 // loop_header_branch
    %16 = sbr.rel (%p14) target = $region8
  $region5: #{fcn_layer_forward.1} parent=0 // loop_body
    %s18 = ssub.s32 %s13, 1
    %s19 = ssub.s32 %s13, 2
    %s20 = sadd.s32 %s13, 1
    %s21 = ssub.s32 %s13, %s20
    %p22 = scmp.eq.s32.totalorder %s21, 0
    %s24 = sadd.s32 %s23, 1
    %s25 = scalar_select %p22, %s23, %s24
    %p28 = pneg %p22
    %p29 = scmp.eq.s32.totalorder %s13, 1
    %p30 = por %p28, %p29
    %p31 = scmp.ne.s32.totalorder %s23, %s26
    %p32 = scmp.eq.s32.totalorder %s13, 0
    %p33 = por %p31, %p32
    %p34 = scmp.ne.s32.totalorder %s23, %s26
    %p35 = scmp.eq.s32.totalorder %s18, 1
    %p36 = por %p34, %p35
    %p37 = scmp.ne.s32.totalorder %s26, %s27
    %p38 = scmp.eq.s32.totalorder %s18, 0
    %p39 = por %p37, %p38
    %p40 = scmp.ne.s32.totalorder %s26, %s27
    %p41 = scmp.eq.s32.totalorder %s19, 1
    %p42 = por %p40, %p41
    %p44 = scmp.ne.s32.totalorder %s27, %s43
    %p45 = scmp.eq.s32.totalorder %s19, 0
    %p46 = por %p44, %p45
    %s48 = sadd.s32 %s47, 1
    %p51 = scmp.eq.s32.totalorder %s13, 1
    %p52 = scmp.ne.s32.totalorder %s47, %s49
    %p53 = scmp.eq.s32.totalorder %s13, 0
    %p54 = por %p52, %p53
    %p55 = scmp.ne.s32.totalorder %s47, %s49
    %p56 = scmp.eq.s32.totalorder %s18, 1
    %p57 = por %p55, %p56
    %p58 = scmp.ne.s32.totalorder %s49, %s50
    %p59 = scmp.eq.s32.totalorder %s18, 0
    %p60 = por %p58, %p59
    %p61 = scmp.ne.s32.totalorder %s49, %s50
    %p62 = scmp.eq.s32.totalorder %s19, 1
    %p63 = por %p61, %p62
    %p65 = scmp.ne.s32.totalorder %s50, %s64
    %p66 = scmp.eq.s32.totalorder %s19, 0
    %p67 = por %p65, %p66
    %s69 = sadd.s32 %s68, 1
    %p72 = scmp.eq.s32.totalorder %s13, 1
    %p73 = scmp.ne.s32.totalorder %s68, %s70
    %p74 = scmp.eq.s32.totalorder %s13, 0
    %p75 = por %p73, %p74
    %p76 = scmp.ne.s32.totalorder %s68, %s70
    %p77 = scmp.eq.s32.totalorder %s18, 1
    %p78 = por %p76, %p77
    %p79 = scmp.ne.s32.totalorder %s70, %s71
    %p80 = scmp.eq.s32.totalorder %s18, 0
    %p81 = por %p79, %p80
    %p82 = scmp.ne.s32.totalorder %s70, %s71
    %p83 = scmp.eq.s32.totalorder %s19, 1
    %p84 = por %p82, %p83
    %p86 = scmp.ne.s32.totalorder %s71, %s85
    %p87 = scmp.eq.s32.totalorder %s19, 0
    %p88 = por %p86, %p87
    %s90 = sadd.s32 %s89, 1
    %p93 = scmp.eq.s32.totalorder %s13, 1
    %p94 = scmp.ne.s32.totalorder %s89, %s91
    %p95 = scmp.eq.s32.totalorder %s13, 0
    %p96 = por %p94, %p95
    %p97 = scmp.ne.s32.totalorder %s89, %s91
    %p98 = scmp.eq.s32.totalorder %s18, 1
    %p99 = por %p97, %p98
    %p100 = scmp.ne.s32.totalorder %s91, %s92
    %p101 = scmp.eq.s32.totalorder %s18, 0
    %p102 = por %p100, %p101
    %p103 = scmp.ne.s32.totalorder %s91, %s92
    %p104 = scmp.eq.s32.totalorder %s19, 1
    %p105 = por %p103, %p104
    %p107 = scmp.ne.s32.totalorder %s92, %s106
    %p108 = scmp.eq.s32.totalorder %s19, 0
    %p109 = por %p107, %p108
    %s111 = sadd.s32 %s110, 1
    %p114 = scmp.eq.s32.totalorder %s13, 1
    %p115 = scmp.ne.s32.totalorder %s110, %s112
    %p116 = scmp.eq.s32.totalorder %s13, 0
    %p117 = por %p115, %p116
    %p118 = scmp.ne.s32.totalorder %s110, %s112
    %p119 = scmp.eq.s32.totalorder %s18, 1
    %p120 = por %p118, %p119
    %p121 = scmp.ne.s32.totalorder %s112, %s113
    %p122 = scmp.eq.s32.totalorder %s18, 0
    %p123 = por %p121, %p122
    %p124 = scmp.ne.s32.totalorder %s112, %s113
    %p125 = scmp.eq.s32.totalorder %s19, 1
    %p126 = por %p124, %p125
    %p128 = scmp.ne.s32.totalorder %s113, %s127
    %p129 = scmp.eq.s32.totalorder %s19, 0
    %p130 = por %p128, %p129
    %s132 = sadd.s32 %s131, 1
    %p135 = scmp.eq.s32.totalorder %s13, 1
    %p136 = scmp.ne.s32.totalorder %s131, %s133
    %p137 = scmp.eq.s32.totalorder %s13, 0
    %p138 = por %p136, %p137
    %p139 = scmp.ne.s32.totalorder %s131, %s133
    %p140 = scmp.eq.s32.totalorder %s18, 1
    %p141 = por %p139, %p140
    %p142 = scmp.ne.s32.totalorder %s133, %s134
    %p143 = scmp.eq.s32.totalorder %s18, 0
    %p144 = por %p142, %p143
    %p145 = scmp.ne.s32.totalorder %s133, %s134
    %p146 = scmp.eq.s32.totalorder %s19, 1
    %p147 = por %p145, %p146
    %p149 = scmp.ne.s32.totalorder %s134, %s148
    %p150 = scmp.eq.s32.totalorder %s19, 0
    %p151 = por %p149, %p150
    %s153 = sadd.s32 %s152, 1
    %p156 = scmp.eq.s32.totalorder %s13, 1
    %p157 = scmp.ne.s32.totalorder %s152, %s154
    %p158 = scmp.eq.s32.totalorder %s13, 0
    %p159 = por %p157, %p158
    %p160 = scmp.ne.s32.totalorder %s152, %s154
    %p161 = scmp.eq.s32.totalorder %s18, 1
    %p162 = por %p160, %p161
    %p163 = scmp.ne.s32.totalorder %s154, %s155
    %p164 = scmp.eq.s32.totalorder %s18, 0
    %p165 = por %p163, %p164
    %p166 = scmp.ne.s32.totalorder %s154, %s155
    %p167 = scmp.eq.s32.totalorder %s19, 1
    %p168 = por %p166, %p167
    %p170 = scmp.ne.s32.totalorder %s155, %s169
    %p171 = scmp.eq.s32.totalorder %s19, 0
    %p172 = por %p170, %p171
    %s173 = ssub.s32 %s13, %s20
    %p174 = scmp.eq.s32.totalorder %s173, 0
    %s176 = sadd.s32 %s175, 1
    %s177 = scalar_select %p174, %s175, %s176
    %p180 = pneg %p174
    %p181 = scmp.eq.s32.totalorder %s13, 1
    %p182 = por %p180, %p181
    %p183 = scmp.ne.s32.totalorder %s175, %s178
    %p184 = scmp.eq.s32.totalorder %s13, 0
    %p185 = por %p183, %p184
    %p186 = scmp.ne.s32.totalorder %s175, %s178
    %p187 = scmp.eq.s32.totalorder %s18, 1
    %p188 = por %p186, %p187
    %p189 = scmp.ne.s32.totalorder %s178, %s179
    %p190 = scmp.eq.s32.totalorder %s18, 0
    %p191 = por %p189, %p190
    %p192 = scmp.ne.s32.totalorder %s178, %s179
    %p193 = scmp.eq.s32.totalorder %s19, 1
    %p194 = por %p192, %p193
    %p196 = scmp.ne.s32.totalorder %s179, %s195
    %p197 = scmp.eq.s32.totalorder %s19, 0
    %p198 = por %p196, %p197
    %p199 = scmp.le.s32.totalorder 1, %s13
    %p200 = scmp.lt.s32.totalorder %s13, 3
    %p201 = pnand %p199, %p200
    %p202 = pneg %p201
    // Predicated region
    $region9: #{fcn_layer_forward.1} parent=5 // pred_check
      _
    $region10: #{fcn_layer_forward.1} parent=5 // pred_check_branch
      %204 = sbr.rel (%p201) target = $region12
    $region11: #{fcn_layer_forward.1} parent=5 // pred_region
      %s205 = ssub.s32 %s13, 1
      // Predicated region
      $region13: #{fcn_layer_forward.1} parent=11 // pred_check
        %p206 = pneg %p60
      $region14: #{fcn_layer_forward.1} parent=11 // pred_check_branch
        %208 = sbr.rel (%p206) target = $region16
      $region15: #{fcn_layer_forward.1} parent=11 // pred_region
        _
      $region16: #{fcn_layer_forward.1} parent=11 // pred_fallthru
        _
      // Predicated region
      $region17: #{fcn_layer_forward.1} parent=11 // pred_check
        %p209 = pneg %p81
      $region18: #{fcn_layer_forward.1} parent=11 // pred_check_branch
        %211 = sbr.rel (%p209) target = $region20
      $region19: #{fcn_layer_forward.1} parent=11 // pred_region
        _
      $region20: #{fcn_layer_forward.1} parent=11 // pred_fallthru
        _
      // Predicated region
      $region21: #{fcn_layer_forward.1} parent=11 // pred_check
        %p212 = pneg %p102
      $region22: #{fcn_layer_forward.1} parent=11 // pred_check_branch
        %214 = sbr.rel (%p212) target = $region24
      $region23: #{fcn_layer_forward.1} parent=11 // pred_region
        _
      $region24: #{fcn_layer_forward.1} parent=11 // pred_fallthru
        _
      // Predicated region
      $region25: #{fcn_layer_forward.1} parent=11 // pred_check
        %p215 = pneg %p123
      $region26: #{fcn_layer_forward.1} parent=11 // pred_check_branch
        %217 = sbr.rel (%p215) target = $region28
      $region27: #{fcn_layer_forward.1} parent=11 // pred_region
        _
      $region28: #{fcn_layer_forward.1} parent=11 // pred_fallthru
        _
      // Predicated region
      $region29: #{fcn_layer_forward.1} parent=11 // pred_check
        %p218 = pneg %p144
      $region30: #{fcn_layer_forward.1} parent=11 // pred_check_branch
        %220 = sbr.rel (%p218) target = $region32
      $region31: #{fcn_layer_forward.1} parent=11 // pred_region
        _
      $region32: #{fcn_layer_forward.1} parent=11 // pred_fallthru
        _
      // Predicated region
      $region33: #{fcn_layer_forward.1} parent=11 // pred_check
        %p221 = pneg %p165
      $region34: #{fcn_layer_forward.1} parent=11 // pred_check_branch
        %223 = sbr.rel (%p221) target = $region36
      $region35: #{fcn_layer_forward.1} parent=11 // pred_region
        _
      $region36: #{fcn_layer_forward.1} parent=11 // pred_fallthru
        _
    $region12: #{fcn_layer_forward.1} parent=5 // pred_fallthru
      _
    %p224 = scmp.lt.s32.totalorder %s13, 2
    // Predicated region
    $region37: #{fcn_layer_forward.1} parent=5 // pred_check
      %p225 = pneg %p224
    $region38: #{fcn_layer_forward.1} parent=5 // pred_check_branch
      %227 = sbr.rel (%p225) target = $region40
    $region39: #{fcn_layer_forward.1} parent=5 // pred_region
      // Predicated region
      $region41: #{fcn_layer_forward.1} parent=39 // pred_check
        %p228 = pneg %p33
      $region42: #{fcn_layer_forward.1} parent=39 // pred_check_branch
        %230 = sbr.rel (%p228) target = $region44
      $region43: #{fcn_layer_forward.1} parent=39 // pred_region
        %p231 = scmp.lt.s32.totalorder %s13, 1
        %s232 = scalar_select %p231, %s13, 1
        %s233 = smul.addr %s232, 3
        %s234 = smul.addr %s233, 4
        %s235 = scalar_lea.vmem %s0, %s234
      $region44: #{fcn_layer_forward.1} parent=39 // pred_fallthru
        _
    $region40: #{fcn_layer_forward.1} parent=5 // pred_fallthru
      _
    %p236 = scmp.le.s32.totalorder 1, %s13
    %p237 = scmp.lt.s32.totalorder %s13, 3
    %p238 = pnand %p236, %p237
    %p239 = pneg %p238
    // Predicated region
    $region45: #{fcn_layer_forward.1} parent=5 // pred_check
      _
    $region46: #{fcn_layer_forward.1} parent=5 // pred_check_branch
      %241 = sbr.rel (%p238) target = $region48
    $region47: #{fcn_layer_forward.1} parent=5 // pred_region
      %s242 = ssub.s32 %s13, 1
      %p243 = scmp.lt.s32.totalorder %s18, 1
      %s244 = scalar_select %p243, %s18, 1
      %s245 = smul.addr %s244, 3
      %s246 = smul.addr %s245, 4
      %s247 = scalar_lea.vmem %s0, %s246
      %p248 = pneg %p39
      %p249 = pneg %p36
      %p250 = pneg %p60
      %p251 = pneg %p57
      %p252 = pneg %p81
      %p253 = pneg %p78
      %p254 = pneg %p102
      %p255 = pneg %p99
      %p256 = pneg %p123
      %p257 = pneg %p120
      %p258 = pneg %p144
      %p259 = pneg %p141
      %p260 = pneg %p165
      %p261 = pneg %p162
      %p262 = pneg %p191
      %p263 = pneg %p188
      %p264 = scmp.lt.s32.totalorder %s18, 1
      %s265 = scalar_select %p264, %s18, 1
      %s266 = smul.addr %s265, 2
      %s267 = smul.addr %s266, 8
      %s268 = scalar_lea.vmem %s7, %s267
      %p269 = scmp.lt.s32.totalorder %s18, 1
      %s270 = scalar_select %p269, %s18, 1
      %s271 = smul.addr %s270, 3
      %s272 = smul.addr %s271, 4
      %s273 = scalar_lea.vmem %s0, %s272
      %p274 = scmp.lt.s32.totalorder %s18, 1
      %s275 = scalar_select %p274, %s18, 1
      %s276 = smul.addr %s275, 2
      %s277 = smul.addr %s276, 8
      %s278 = scalar_lea.vmem %s7, %s277
      %v280 = vld [vmem:[%s273] sm:$0xf]
      %v281 = vld [vmem:[%s273 + $0x4] sm:$0xf]
      %v282 = vld [vmem:[%s1] sm:$0xf]
      %v283 = vld [vmem:[%s1 + $0x4] sm:$0xf]
      %v284 = vld [vmem:[%s1 + $0x8] sm:$0xf]
      %v285 = vld [vmem:[%s1 + $0xc] sm:$0xf]
      %v286 = vld [vmem:[%s1 + $0x10] sm:$0xf]
      %v287 = vld [vmem:[%s1 + $0x14] sm:$0xf]
      %v288 = vld [vmem:[%s1 + $0x18] sm:$0xf]
      %v289 = vld [vmem:[%s1 + $0x1c] sm:$0xf]
      %v290 = vld [vmem:[%s273 + $0x8] sm:$0x1]
      %s291 = scalar_lea.vmem %s1, 32
      %v292 = vld [vmem:[%s291] sm:$0xf]
      %v293 = vld [vmem:[%s291 + $0x4] sm:$0xf]
      %v294 = vld [vmem:[%s291 + $0x8] sm:$0xf]
      %v295 = vld [vmem:[%s291 + $0xc] sm:$0xf]
      %v296 = vld [vmem:[%s291 + $0x10] sm:$0xf]
      %v297 = vld [vmem:[%s291 + $0x14] sm:$0xf]
      %v298 = vld [vmem:[%s291 + $0x18] sm:$0xf]
      %v299 = vld [vmem:[%s291 + $0x1c] sm:$0xf]
      %v303 = vunpack.c.l.b16 %v280
      %v304 = vunpack.c.l.b16 %v281
      %v305 = vunpack.c.l.b16 %v290
      %v306 = vpack.c.b16 %v304, %v303
      %v307 = vpack.c.b16 %v305, %v305
      %vm308 = vsmask.f32 7424
      %v310 = vshrl.u32 %v306, 16
      %v312 = vshll.u32 %v306, 16
      %v314 = vrot.slane %v312, 1
      %v315 = vor.u32 %v310, %v314
      %v317 = vshll.u32 %v307, 16
      %v319 = vrot.slane %v317, 1
      %v320 = vsel %vm308, %v315, %v319
      %v329 = vunpack.c.l.b16 %v292
      %v330 = vunpack.c.l.b16 %v293
      %v331 = vunpack.c.l.b16 %v294
      %v332 = vunpack.c.l.b16 %v295
      %v333 = vunpack.c.l.b16 %v296
      %v334 = vunpack.c.l.b16 %v297
      %v335 = vunpack.c.l.b16 %v298
      %v336 = vunpack.c.l.b16 %v299
      %v337 = vpack.c.b16 %v330, %v329
      %v338 = vpack.c.b16 %v332, %v331
      %v339 = vpack.c.b16 %v334, %v333
      %v340 = vpack.c.b16 %v336, %v335
      %vm345 = vcmask 523264
      %v347 = vsel %vm345, %v320, 0
      %349 = vmatprep.subr.bf16.mxu0 0
      %350 = vmatpush1.bf16.msra.mxu0 %v337
      %351 = vmatprep.subr.bf16.mxu0 0
      %352 = vmatpush1.bf16.msra.mxu0 %v338
      %353 = vmatprep.subr.bf16.mxu0 0
      %354 = vmatpush1.bf16.msra.mxu0 %v339
      %355 = vmatprep.subr.bf16.mxu0 0
      %356 = vmatpush1.bf16.msra.mxu0 %v340
      %357 = vmatprep.subr.bf16.mxu0 0
      %358 = vmatpush1.bf16.msra.mxu0 0
      %359 = vmatprep.subr.bf16.mxu0 0
      %360 = vmatpush1.bf16.msra.mxu0 0
      %361 = vmatprep.subr.bf16.mxu0 0
      %362 = vmatpush1.bf16.msra.mxu0 0
      %363 = vmatprep.subr.bf16.mxu0 0
      %364 = vmatpush1.bf16.msra.mxu0 0
      %365 = vmatprep.subr.bf16.mxu0 0
      %366 = vmatpush1.bf16.msra.mxu0 0
      %367 = vmatprep.subr.bf16.mxu0 0
      %368 = vmatpush1.bf16.msra.mxu0 0
      %369 = vmatprep.subr.bf16.mxu0 0
      %370 = vmatpush1.bf16.msra.mxu0 0
      %371 = vmatprep.subr.bf16.mxu0 0
      %372 = vmatpush1.bf16.msra.mxu0 0
      %373 = vmatprep.subr.bf16.mxu0 0
      %374 = vmatpush1.bf16.msra.mxu0 0
      %375 = vmatprep.subr.bf16.mxu0 0
      %376 = vmatpush1.bf16.msra.mxu0 0
      %377 = vmatprep.subr.bf16.mxu0 0
      %378 = vmatpush1.bf16.msra.mxu0 0
      %379 = vmatprep.subr.bf16.mxu0 0
      %380 = vmatpush1.bf16.msra.mxu0 0
      %381 = vmatprep.mubr.bf16.mxu0 0
      %382 = vmatmul.mubr.bf16.gmra.mrb[0].mxu0 %v347
      %v383 = vpop.f32.mrb[0].mxu0
      %v384 = vadd.f32 0.0, %v383
      %v385 = vpop.f32.mrb[0].mxu0
      %v386 = vpop.f32.mrb[0].mxu0
      %v387 = vadd.f32 0.0, %v386
      %v388 = vpop.f32.mrb[0].mxu0
      %389 = vdwg.mxu0
      %v398 = vunpack.c.l.b16 %v282
      %v399 = vunpack.c.l.b16 %v283
      %v400 = vunpack.c.l.b16 %v284
      %v401 = vunpack.c.l.b16 %v285
      %v402 = vunpack.c.l.b16 %v286
      %v403 = vunpack.c.l.b16 %v287
      %v404 = vunpack.c.l.b16 %v288
      %v405 = vunpack.c.l.b16 %v289
      %v406 = vpack.c.b16 %v399, %v398
      %v407 = vpack.c.b16 %v401, %v400
      %v408 = vpack.c.b16 %v403, %v402
      %v409 = vpack.c.b16 %v405, %v404
      %v414 = vsel %vm345, %v306, 0
      %416 = vmatprep.subr.bf16.mxu0 0
      %417 = vmatpush1.bf16.msra.mxu0 %v406
      %418 = vmatprep.subr.bf16.mxu0 0
      %419 = vmatpush1.bf16.msra.mxu0 %v407
      %420 = vmatprep.subr.bf16.mxu0 0
      %421 = vmatpush1.bf16.msra.mxu0 %v408
      %422 = vmatprep.subr.bf16.mxu0 0
      %423 = vmatpush1.bf16.msra.mxu0 %v409
      %424 = vmatprep.subr.bf16.mxu0 0
      %425 = vmatpush1.bf16.msra.mxu0 0
      %426 = vmatprep.subr.bf16.mxu0 0
      %427 = vmatpush1.bf16.msra.mxu0 0
      %428 = vmatprep.subr.bf16.mxu0 0
      %429 = vmatpush1.bf16.msra.mxu0 0
      %430 = vmatprep.subr.bf16.mxu0 0
      %431 = vmatpush1.bf16.msra.mxu0 0
      %432 = vmatprep.subr.bf16.mxu0 0
      %433 = vmatpush1.bf16.msra.mxu0 0
      %434 = vmatprep.subr.bf16.mxu0 0
      %435 = vmatpush1.bf16.msra.mxu0 0
      %436 = vmatprep.subr.bf16.mxu0 0
      %437 = vmatpush1.bf16.msra.mxu0 0
      %438 = vmatprep.subr.bf16.mxu0 0
      %439 = vmatpush1.bf16.msra.mxu0 0
      %440 = vmatprep.subr.bf16.mxu0 0
      %441 = vmatpush1.bf16.msra.mxu0 0
      %442 = vmatprep.subr.bf16.mxu0 0
      %443 = vmatpush1.bf16.msra.mxu0 0
      %444 = vmatprep.subr.bf16.mxu0 0
      %445 = vmatpush1.bf16.msra.mxu0 0
      %446 = vmatprep.subr.bf16.mxu0 0
      %447 = vmatpush1.bf16.msra.mxu0 0
      %448 = vmatprep.mubr.bf16.mxu0 0
      %449 = vmatmul.mubr.bf16.gmra.mrb[0].mxu0 %v414
      %v450 = vpop.f32.mrb[0].mxu0
      %v451 = vadd.f32 %v384, %v450
      %v452 = vpop.f32.mrb[0].mxu0
      %v453 = vpop.f32.mrb[0].mxu0
      %v454 = vadd.f32 %v387, %v453
      %v455 = vpop.f32.mrb[0].mxu0
      %456 = vdwg.mxu0
      %v457 = vld [vmem:[%s273] sm:$0xe]
      %s458 = scalar_lea.vmem %s1, 64
      %v459 = vld [vmem:[%s458] sm:$0xf]
      %v460 = vld [vmem:[%s458 + $0x4] sm:$0xf]
      %v461 = vld [vmem:[%s458 + $0x8] sm:$0xf]
      %v462 = vld [vmem:[%s458 + $0xc] sm:$0xf]
      %v463 = vld [vmem:[%s458 + $0x10] sm:$0xf]
      %v464 = vld [vmem:[%s458 + $0x14] sm:$0xf]
      %v465 = vld [vmem:[%s458 + $0x18] sm:$0xf]
      %v466 = vld [vmem:[%s458 + $0x1c] sm:$0xf]
      %v468 = vunpack.c.l.b16 %v457
      %v469 = vpack.c.b16 %v304, %v468
      %vm470 = vcmask 1046528
      %v471 = vrot.slane %v469, 1
      %v472 = vrot.slane %v307, 1
      %v473 = vsel %vm470, %v471, %v472
      %v482 = vunpack.c.l.b16 %v459
      %v483 = vunpack.c.l.b16 %v460
      %v484 = vunpack.c.l.b16 %v461
      %v485 = vunpack.c.l.b16 %v462
      %v486 = vunpack.c.l.b16 %v463
      %v487 = vunpack.c.l.b16 %v464
      %v488 = vunpack.c.l.b16 %v465
      %v489 = vunpack.c.l.b16 %v466
      %v490 = vpack.c.b16 %v483, %v482
      %v491 = vpack.c.b16 %v485, %v484
      %v492 = vpack.c.b16 %v487, %v486
      %v493 = vpack.c.b16 %v489, %v488
      %v499 = vsel %vm345, %v473, 0
      %501 = vmatprep.subr.bf16.mxu0 0
      %502 = vmatpush1.bf16.msra.mxu0 %v490
      %503 = vmatprep.subr.bf16.mxu0 0
      %504 = vmatpush1.bf16.msra.mxu0 %v491
      %505 = vmatprep.subr.bf16.mxu0 0
      %506 = vmatpush1.bf16.msra.mxu0 %v492
      %507 = vmatprep.subr.bf16.mxu0 0
      %508 = vmatpush1.bf16.msra.mxu0 %v493
      %509 = vmatprep.subr.bf16.mxu0 0
      %510 = vmatpush1.bf16.msra.mxu0 0
      %511 = vmatprep.subr.bf16.mxu0 0
      %512 = vmatpush1.bf16.msra.mxu0 0
      %513 = vmatprep.subr.bf16.mxu0 0
      %514 = vmatpush1.bf16.msra.mxu0 0
      %515 = vmatprep.subr.bf16.mxu0 0
      %516 = vmatpush1.bf16.msra.mxu0 0
      %517 = vmatprep.subr.bf16.mxu0 0
      %518 = vmatpush1.bf16.msra.mxu0 0
      %519 = vmatprep.subr.bf16.mxu0 0
      %520 = vmatpush1.bf16.msra.mxu0 0
      %521 = vmatprep.subr.bf16.mxu0 0
      %522 = vmatpush1.bf16.msra.mxu0 0
      %523 = vmatprep.subr.bf16.mxu0 0
      %524 = vmatpush1.bf16.msra.mxu0 0
      %525 = vmatprep.subr.bf16.mxu0 0
      %526 = vmatpush1.bf16.msra.mxu0 0
      %527 = vmatprep.subr.bf16.mxu0 0
      %528 = vmatpush1.bf16.msra.mxu0 0
      %529 = vmatprep.subr.bf16.mxu0 0
      %530 = vmatpush1.bf16.msra.mxu0 0
      %531 = vmatprep.subr.bf16.mxu0 0
      %532 = vmatpush1.bf16.msra.mxu0 0
      %533 = vmatprep.mubr.bf16.mxu0 0
      %534 = vmatmul.mubr.bf16.gmra.mrb[0].mxu0 %v499
      %v535 = vpop.f32.mrb[0].mxu0
      %v536 = vadd.f32 0.0, %v535
      %v537 = vpop.f32.mrb[0].mxu0
      %v538 = vpop.f32.mrb[0].mxu0
      %v539 = vadd.f32 0.0, %v538
      %v540 = vpop.f32.mrb[0].mxu0
      %541 = vdwg.mxu0
      %v542 = vadd.f32 %v451, %v536
      %v543 = vadd.f32 %v454, %v539
      %v544 = vld [vmem:[%s2] sm:$0x1]
      %v546 = vlaneseq
      %v547 = vshrl.u32 %v546, 7
      %v548 = vsub.s32 0, %v547
      %v549 = vrot.slane %v544, %v548
      %v551 = vmul.f32 %v542, %v549
      %v552 = vmul.f32 %v543, %v549
      %v553 = vld [vmem:[%s3] sm:$0x1]
      %v555 = vlaneseq
      %v556 = vshrl.u32 %v555, 7
      %v557 = vsub.s32 0, %v556
      %v558 = vrot.slane %v553, %v557
      %v560 = vadd.f32 %v551, %v558
      %v561 = vadd.f32 %v552, %v558
      %v562 = vmax.f32 %v560, 0.0
      %v563 = vmax.f32 %v561, 0.0
      %vm564 = vcmask 1040384
      %vm565 = vsmask.f32 256
      %vm566 = vmand %vm564, %vm565
      %v567 = vld [vmem:[#allocation2] sm:$0x1]
      %v568 = vsel %vm566, 0, %v567
      %569 = vst [vmem:[#allocation2] sm:$0x1] %v568
      %vm570 = vsmask.f32 7938
      %vm571 = vmand %vm564, %vm570
      %v572 = vld [vmem:[#allocation2 + $0x8] sm:$0x1]
      %v573 = vsel %vm571, 0, %v572
      %574 = vst [vmem:[#allocation2 + $0x8] sm:$0x1] %v573
      %v575 = vpack.c.bf16 %v563, %v562
      %v577 = vunpack.c.l.b16 %v575
      %v578 = vunpack.c.h.b16 %v575
      %v579 = vpack.c.b16 %v577, %v577
      %v580 = vpack.c.b16 %v578, %v578
      %vm581 = vsmask.f32 4368
      %vm582 = vmor %vm565, %vm581
      %v584 = vshrl.u32 %v579, 16
      %v586 = vrot.slane %v584, 7
      %v587 = vshll.u32 %v579, 16
      %v589 = vor.u32 %v586, %v587
      %v590 = vrot.slane %v586, 4
      %v592 = vshrl.u32 %v580, 16
      %v594 = vrot.slane %v592, 7
      %v595 = vshll.u32 %v580, 16
      %v597 = vor.u32 %v594, %v595
      %v598 = vsel %vm582, %v590, %v597
      %v599 = vrot.slane %v594, 4
      %vm603 = vcmask 1043456
      %vm604 = vmand %vm603, %vm570
      %v605 = vld [vmem:[#allocation2] sm:$0xf]
      %v606 = vsel %vm604, %v589, %v605
      %607 = vst [vmem:[#allocation2] sm:$0xf] %v606
      %608 = vst [vmem:[#allocation2 + $0x4] sm:$0xf] %v598
      %v609 = vld [vmem:[#allocation2 + $0x8] sm:$0x1]
      %v610 = vsel %vm566, %v599, %v609
      %611 = vst [vmem:[#allocation2 + $0x8] sm:$0x1] %v610
      %v612 = vld [vmem:[#allocation2] sm:$0xf]
      %v613 = vld [vmem:[#allocation2 + $0x4] sm:$0xf]
      %v614 = vld [vmem:[%s4] sm:$0xf]
      %v615 = vld [vmem:[%s4 + $0x4] sm:$0xf]
      %v616 = vld [vmem:[%s4 + $0x8] sm:$0xf]
      %v617 = vld [vmem:[%s4 + $0xc] sm:$0xf]
      %v618 = vld [vmem:[%s4 + $0x10] sm:$0xf]
      %v619 = vld [vmem:[%s4 + $0x14] sm:$0xf]
      %v620 = vld [vmem:[%s4 + $0x18] sm:$0xf]
      %v621 = vld [vmem:[%s4 + $0x1c] sm:$0xf]
      %v622 = vld [vmem:[%s4 + $0x20] sm:$0xf]
      %v623 = vld [vmem:[%s4 + $0x24] sm:$0xf]
      %v624 = vld [vmem:[%s4 + $0x28] sm:$0xf]
      %v625 = vld [vmem:[%s4 + $0x2c] sm:$0xf]
      %v626 = vld [vmem:[%s4 + $0x30] sm:$0xf]
      %v627 = vld [vmem:[%s4 + $0x34] sm:$0xf]
      %v628 = vld [vmem:[%s4 + $0x38] sm:$0xf]
      %v629 = vld [vmem:[%s4 + $0x3c] sm:$0xf]
      %v630 = vld [vmem:[#allocation2 + $0x8] sm:$0x1]
      %s631 = scalar_lea.vmem %s4, 64
      %v632 = vld [vmem:[%s631] sm:$0xf]
      %v633 = vld [vmem:[%s631 + $0x4] sm:$0xf]
      %v634 = vld [vmem:[%s631 + $0x8] sm:$0xf]
      %v635 = vld [vmem:[%s631 + $0xc] sm:$0xf]
      %v636 = vld [vmem:[%s631 + $0x10] sm:$0xf]
      %v637 = vld [vmem:[%s631 + $0x14] sm:$0xf]
      %v638 = vld [vmem:[%s631 + $0x18] sm:$0xf]
      %v639 = vld [vmem:[%s631 + $0x1c] sm:$0xf]
      %v640 = vld [vmem:[%s631 + $0x20] sm:$0xf]
      %v641 = vld [vmem:[%s631 + $0x24] sm:$0xf]
      %v642 = vld [vmem:[%s631 + $0x28] sm:$0xf]
      %v643 = vld [vmem:[%s631 + $0x2c] sm:$0xf]
      %v644 = vld [vmem:[%s631 + $0x30] sm:$0xf]
      %v645 = vld [vmem:[%s631 + $0x34] sm:$0xf]
      %v646 = vld [vmem:[%s631 + $0x38] sm:$0xf]
      %v647 = vld [vmem:[%s631 + $0x3c] sm:$0xf]
      %v651 = vunpack.c.l.b16 %v612
      %v652 = vunpack.c.l.b16 %v613
      %v653 = vunpack.c.l.b16 %v630
      %v654 = vpack.c.b16 %v652, %v651
      %v655 = vpack.c.b16 %v653, %v653
      %v657 = vshrl.u32 %v654, 16
      %v659 = vshll.u32 %v654, 16
      %v661 = vrot.slane %v659, 1
      %v662 = vor.u32 %v657, %v661
      %v664 = vshll.u32 %v655, 16
      %v666 = vrot.slane %v664, 1
      %v667 = vsel %vm308, %v662, %v666
      %v685 = vunpack.c.l.b16 %v632
      %v686 = vunpack.c.l.b16 %v633
      %v687 = vunpack.c.l.b16 %v634
      %v688 = vunpack.c.l.b16 %v635
      %v689 = vunpack.c.l.b16 %v636
      %v690 = vunpack.c.l.b16 %v637
      %v691 = vunpack.c.l.b16 %v638
      %v692 = vunpack.c.l.b16 %v639
      %v693 = vunpack.c.l.b16 %v640
      %v694 = vunpack.c.l.b16 %v641
      %v695 = vunpack.c.l.b16 %v642
      %v696 = vunpack.c.l.b16 %v643
      %v697 = vunpack.c.l.b16 %v644
      %v698 = vunpack.c.l.b16 %v645
      %v699 = vunpack.c.l.b16 %v646
      %v700 = vunpack.c.l.b16 %v647
      %v701 = vpack.c.b16 %v686, %v685
      %v702 = vpack.c.b16 %v688, %v687
      %v703 = vpack.c.b16 %v690, %v689
      %v704 = vpack.c.b16 %v692, %v691
      %v705 = vpack.c.b16 %v694, %v693
      %v706 = vpack.c.b16 %v696, %v695
      %v707 = vpack.c.b16 %v698, %v697
      %v708 = vpack.c.b16 %v700, %v699
      %717 = vmatprep.subr.bf16.mxu0 0
      %718 = vmatpush1.bf16.msra.mxu0 %v701
      %719 = vmatprep.subr.bf16.mxu0 0
      %720 = vmatpush1.bf16.msra.mxu0 %v702
      %721 = vmatprep.subr.bf16.mxu0 0
      %722 = vmatpush1.bf16.msra.mxu0 %v703
      %723 = vmatprep.subr.bf16.mxu0 0
      %724 = vmatpush1.bf16.msra.mxu0 %v704
      %725 = vmatprep.subr.bf16.mxu0 0
      %726 = vmatpush1.bf16.msra.mxu0 %v705
      %727 = vmatprep.subr.bf16.mxu0 0
      %728 = vmatpush1.bf16.msra.mxu0 %v706
      %729 = vmatprep.subr.bf16.mxu0 0
      %730 = vmatpush1.bf16.msra.mxu0 %v707
      %731 = vmatprep.subr.bf16.mxu0 0
      %732 = vmatpush1.bf16.msra.mxu0 %v708
      %733 = vmatprep.subr.bf16.mxu0 0
      %734 = vmatpush1.bf16.msra.mxu0 0
      %735 = vmatprep.subr.bf16.mxu0 0
      %736 = vmatpush1.bf16.msra.mxu0 0
      %737 = vmatprep.subr.bf16.mxu0 0
      %738 = vmatpush1.bf16.msra.mxu0 0
      %739 = vmatprep.subr.bf16.mxu0 0
      %740 = vmatpush1.bf16.msra.mxu0 0
      %741 = vmatprep.subr.bf16.mxu0 0
      %742 = vmatpush1.bf16.msra.mxu0 0
      %743 = vmatprep.subr.bf16.mxu0 0
      %744 = vmatpush1.bf16.msra.mxu0 0
      %745 = vmatprep.subr.bf16.mxu0 0
      %746 = vmatpush1.bf16.msra.mxu0 0
      %747 = vmatprep.subr.bf16.mxu0 0
      %748 = vmatpush1.bf16.msra.mxu0 0
      %749 = vmatprep.mubr.bf16.mxu0 0
      %750 = vmatmul.mubr.bf16.gmra.mrb[0].mxu0 %v667
      %v751 = vpop.f32.mrb[0].mxu0
      %v752 = vadd.f32 0.0, %v751
      %v753 = vpop.f32.mrb[0].mxu0
      %v754 = vpop.f32.mrb[0].mxu0
      %v755 = vadd.f32 0.0, %v754
      %v756 = vpop.f32.mrb[0].mxu0
      %757 = vdwg.mxu0
      %v775 = vunpack.c.l.b16 %v614
      %v776 = vunpack.c.l.b16 %v615
      %v777 = vunpack.c.l.b16 %v616
      %v778 = vunpack.c.l.b16 %v617
      %v779 = vunpack.c.l.b16 %v618
      %v780 = vunpack.c.l.b16 %v619
      %v781 = vunpack.c.l.b16 %v620
      %v782 = vunpack.c.l.b16 %v621
      %v783 = vunpack.c.l.b16 %v622
      %v784 = vunpack.c.l.b16 %v623
      %v785 = vunpack.c.l.b16 %v624
      %v786 = vunpack.c.l.b16 %v625
      %v787 = vunpack.c.l.b16 %v626
      %v788 = vunpack.c.l.b16 %v627
      %v789 = vunpack.c.l.b16 %v628
      %v790 = vunpack.c.l.b16 %v629
      %v791 = vpack.c.b16 %v776, %v775
      %v792 = vpack.c.b16 %v778, %v777
      %v793 = vpack.c.b16 %v780, %v779
      %v794 = vpack.c.b16 %v782, %v781
      %v795 = vpack.c.b16 %v784, %v783
      %v796 = vpack.c.b16 %v786, %v785
      %v797 = vpack.c.b16 %v788, %v787
      %v798 = vpack.c.b16 %v790, %v789
      %807 = vmatprep.subr.bf16.mxu0 0
      %808 = vmatpush1.bf16.msra.mxu0 %v791
      %809 = vmatprep.subr.bf16.mxu0 0
      %810 = vmatpush1.bf16.msra.mxu0 %v792
      %811 = vmatprep.subr.bf16.mxu0 0
      %812 = vmatpush1.bf16.msra.mxu0 %v793
      %813 = vmatprep.subr.bf16.mxu0 0
      %814 = vmatpush1.bf16.msra.mxu0 %v794
      %815 = vmatprep.subr.bf16.mxu0 0
      %816 = vmatpush1.bf16.msra.mxu0 %v795
      %817 = vmatprep.subr.bf16.mxu0 0
      %818 = vmatpush1.bf16.msra.mxu0 %v796
      %819 = vmatprep.subr.bf16.mxu0 0
      %820 = vmatpush1.bf16.msra.mxu0 %v797
      %821 = vmatprep.subr.bf16.mxu0 0
      %822 = vmatpush1.bf16.msra.mxu0 %v798
      %823 = vmatprep.subr.bf16.mxu0 0
      %824 = vmatpush1.bf16.msra.mxu0 0
      %825 = vmatprep.subr.bf16.mxu0 0
      %826 = vmatpush1.bf16.msra.mxu0 0
      %827 = vmatprep.subr.bf16.mxu0 0
      %828 = vmatpush1.bf16.msra.mxu0 0
      %829 = vmatprep.subr.bf16.mxu0 0
      %830 = vmatpush1.bf16.msra.mxu0 0
      %831 = vmatprep.subr.bf16.mxu0 0
      %832 = vmatpush1.bf16.msra.mxu0 0
      %833 = vmatprep.subr.bf16.mxu0 0
      %834 = vmatpush1.bf16.msra.mxu0 0
      %835 = vmatprep.subr.bf16.mxu0 0
      %836 = vmatpush1.bf16.msra.mxu0 0
      %837 = vmatprep.subr.bf16.mxu0 0
      %838 = vmatpush1.bf16.msra.mxu0 0
      %839 = vmatprep.mubr.bf16.mxu0 0
      %840 = vmatmul.mubr.bf16.gmra.mrb[0].mxu0 %v654
      %v841 = vpop.f32.mrb[0].mxu0
      %v842 = vadd.f32 %v752, %v841
      %v843 = vpop.f32.mrb[0].mxu0
      %v844 = vpop.f32.mrb[0].mxu0
      %v845 = vadd.f32 %v755, %v844
      %v846 = vpop.f32.mrb[0].mxu0
      %847 = vdwg.mxu0
      %v848 = vld [vmem:[#allocation2] sm:$0xe]
      %s849 = scalar_lea.vmem %s4, 128
      %v850 = vld [vmem:[%s849] sm:$0xf]
      %v851 = vld [vmem:[%s849 + $0x4] sm:$0xf]
      %v852 = vld [vmem:[%s849 + $0x8] sm:$0xf]
      %v853 = vld [vmem:[%s849 + $0xc] sm:$0xf]
      %v854 = vld [vmem:[%s849 + $0x10] sm:$0xf]
      %v855 = vld [vmem:[%s849 + $0x14] sm:$0xf]
      %v856 = vld [vmem:[%s849 + $0x18] sm:$0xf]
      %v857 = vld [vmem:[%s849 + $0x1c] sm:$0xf]
      %v858 = vld [vmem:[%s849 + $0x20] sm:$0xf]
      %v859 = vld [vmem:[%s849 + $0x24] sm:$0xf]
      %v860 = vld [vmem:[%s849 + $0x28] sm:$0xf]
      %v861 = vld [vmem:[%s849 + $0x2c] sm:$0xf]
      %v862 = vld [vmem:[%s849 + $0x30] sm:$0xf]
      %v863 = vld [vmem:[%s849 + $0x34] sm:$0xf]
      %v864 = vld [vmem:[%s849 + $0x38] sm:$0xf]
      %v865 = vld [vmem:[%s849 + $0x3c] sm:$0xf]
      %v867 = vunpack.c.l.b16 %v848
      %v868 = vpack.c.b16 %v652, %v867
      %v869 = vrot.slane %v868, 1
      %v870 = vrot.slane %v655, 1
      %v871 = vsel %vm470, %v869, %v870
      %v889 = vunpack.c.l.b16 %v850
      %v890 = vunpack.c.l.b16 %v851
      %v891 = vunpack.c.l.b16 %v852
      %v892 = vunpack.c.l.b16 %v853
      %v893 = vunpack.c.l.b16 %v854
      %v894 = vunpack.c.l.b16 %v855
      %v895 = vunpack.c.l.b16 %v856
      %v896 = vunpack.c.l.b16 %v857
      %v897 = vunpack.c.l.b16 %v858
      %v898 = vunpack.c.l.b16 %v859
      %v899 = vunpack.c.l.b16 %v860
      %v900 = vunpack.c.l.b16 %v861
      %v901 = vunpack.c.l.b16 %v862
      %v902 = vunpack.c.l.b16 %v863
      %v903 = vunpack.c.l.b16 %v864
      %v904 = vunpack.c.l.b16 %v865
      %v905 = vpack.c.b16 %v890, %v889
      %v906 = vpack.c.b16 %v892, %v891
      %v907 = vpack.c.b16 %v894, %v893
      %v908 = vpack.c.b16 %v896, %v895
      %v909 = vpack.c.b16 %v898, %v897
      %v910 = vpack.c.b16 %v900, %v899
      %v911 = vpack.c.b16 %v902, %v901
      %v912 = vpack.c.b16 %v904, %v903
      %921 = vmatprep.subr.bf16.mxu0 0
      %922 = vmatpush1.bf16.msra.mxu0 %v905
      %923 = vmatprep.subr.bf16.mxu0 0
      %924 = vmatpush1.bf16.msra.mxu0 %v906
      %925 = vmatprep.subr.bf16.mxu0 0
      %926 = vmatpush1.bf16.msra.mxu0 %v907
      %927 = vmatprep.subr.bf16.mxu0 0
      %928 = vmatpush1.bf16.msra.mxu0 %v908
      %929 = vmatprep.subr.bf16.mxu0 0
      %930 = vmatpush1.bf16.msra.mxu0 %v909
      %931 = vmatprep.subr.bf16.mxu0 0
      %932 = vmatpush1.bf16.msra.mxu0 %v910
      %933 = vmatprep.subr.bf16.mxu0 0
      %934 = vmatpush1.bf16.msra.mxu0 %v911
      %935 = vmatprep.subr.bf16.mxu0 0
      %936 = vmatpush1.bf16.msra.mxu0 %v912
      %937 = vmatprep.subr.bf16.mxu0 0
      %938 = vmatpush1.bf16.msra.mxu0 0
      %939 = vmatprep.subr.bf16.mxu0 0
      %940 = vmatpush1.bf16.msra.mxu0 0
      %941 = vmatprep.subr.bf16.mxu0 0
      %942 = vmatpush1.bf16.msra.mxu0 0
      %943 = vmatprep.subr.bf16.mxu0 0
      %944 = vmatpush1.bf16.msra.mxu0 0
      %945 = vmatprep.subr.bf16.mxu0 0
      %946 = vmatpush1.bf16.msra.mxu0 0
      %947 = vmatprep.subr.bf16.mxu0 0
      %948 = vmatpush1.bf16.msra.mxu0 0
      %949 = vmatprep.subr.bf16.mxu0 0
      %950 = vmatpush1.bf16.msra.mxu0 0
      %951 = vmatprep.subr.bf16.mxu0 0
      %952 = vmatpush1.bf16.msra.mxu0 0
      %953 = vmatprep.mubr.bf16.mxu0 0
      %954 = vmatmul.mubr.bf16.gmra.mrb[0].mxu0 %v871
      %v955 = vpop.f32.mrb[0].mxu0
      %v956 = vadd.f32 0.0, %v955
      %v957 = vpop.f32.mrb[0].mxu0
      %v958 = vpop.f32.mrb[0].mxu0
      %v959 = vadd.f32 0.0, %v958
      %v960 = vpop.f32.mrb[0].mxu0
      %961 = vdwg.mxu0
      %v962 = vadd.f32 %v842, %v956
      %v963 = vadd.f32 %v845, %v959
      %v964 = vld [vmem:[%s5] sm:$0x1]
      %v966 = vlaneseq
      %v967 = vshrl.u32 %v966, 7
      %v968 = vsub.s32 0, %v967
      %v969 = vrot.slane %v964, %v968
      %v971 = vmul.f32 %v962, %v969
      %v972 = vmul.f32 %v963, %v969
      %v973 = vld [vmem:[%s6] sm:$0x1]
      %v975 = vlaneseq
      %v976 = vshrl.u32 %v975, 7
      %v977 = vsub.s32 0, %v976
      %v978 = vrot.slane %v973, %v977
      %v980 = vadd.f32 %v971, %v978
      %v981 = vadd.f32 %v972, %v978
      %v982 = vmax.f32 %v980, 0.0
      %v983 = vmax.f32 %v981, 0.0
      %984 = vst [vmem:[%s278] sm:$0xff] %v982
      %985 = vst [vmem:[%s278 + $0x8] sm:$0xff] %v983
      %p986 = scmp.lt.s32.totalorder %s18, 1
      %s987 = scalar_select %p986, %s18, 1
      %s988 = smul.addr %s987, 2
      %s989 = smul.addr %s988, 8
      %s990 = scalar_lea.vmem %s7, %s989
      // Predicated region
      $region49: #{fcn_layer_forward.1} parent=47 // pred_check
        %p991 = pneg %p188
      $region50: #{fcn_layer_forward.1} parent=47 // pred_check_branch
        %993 = sbr.rel (%p991) target = $region52
      $region51: #{fcn_layer_forward.1} parent=47 // pred_region
        _
      $region52: #{fcn_layer_forward.1} parent=47 // pred_fallthru
        _
    $region48: #{fcn_layer_forward.1} parent=5 // pred_fallthru
      _
    %p994 = scmp.le.s32.totalorder 2, %s13
    // Predicated region
    $region53: #{fcn_layer_forward.1} parent=5 // pred_check
      %p995 = pneg %p994
    $region54: #{fcn_layer_forward.1} parent=5 // pred_check_branch
      %997 = sbr.rel (%p995) target = $region56
    $region55: #{fcn_layer_forward.1} parent=5 // pred_region
      %s998 = ssub.s32 %s13, 2
      // Predicated region
      $region57: #{fcn_layer_forward.1} parent=55 // pred_check
        %p999 = pneg %p194
      $region58: #{fcn_layer_forward.1} parent=55 // pred_check_branch
        %1001 = sbr.rel (%p999) target = $region60
      $region59: #{fcn_layer_forward.1} parent=55 // pred_region
        %p1002 = scmp.lt.s32.totalorder %s19, 1
        %s1003 = scalar_select %p1002, %s19, 1
        %s1004 = smul.addr %s1003, 2
        %s1005 = smul.addr %s1004, 8
        %s1006 = scalar_lea.vmem %s7, %s1005
      $region60: #{fcn_layer_forward.1} parent=55 // pred_fallthru
        _
    $region56: #{fcn_layer_forward.1} parent=5 // pred_fallthru
      _
  $region6: #{fcn_layer_forward.1} parent=0 // loop_footer
    %s17 = sadd.s32 1, %s13
  $region7: #{fcn_layer_forward.1} parent=0 // loop_footer_branch
    %12 = sbr.rel target = $region3
  $region8: #{fcn_layer_forward.1} parent=0 // loop_exit
    _

</llo_original>
